<compile_context>
chip_gen: v7x
topology: tpu7x:2x2x1
jax: 0.10.0
libtpu: 0.0.40
codegen_flags: <defaults>
</compile_context>

<pallas_src>
import functools

import jax
import jax.numpy as jnp
from jax.experimental import pallas as pl
from jax.experimental.pallas import tpu as pltpu

_MIB = 1024 * 1024
_MIN_ROW_BLOCKS = 8  # target minimum grid length along rows (pipelining + 2 TCs)


def _ssf_kernel(x_ref, scale_ref, shift_ref, o_ref, *, compute_dtype):
    # x_ref:     (tm, td) tile of the flattened (folded) input
    # scale_ref: (1, td)  broadcast row
    # shift_ref: (1, td)  broadcast row
    x = x_ref[...].astype(compute_dtype)
    s = scale_ref[...].astype(compute_dtype)
    b = shift_ref[...].astype(compute_dtype)
    o_ref[...] = (x * s + b).astype(o_ref.dtype)


def _sublane_multiple(dtype) -> int:
    # Packing granularity along sublanes (perf; legality only needs mult. of 8).
    # TPUs have no useful f64 path; >=4-byte dtypes all pack at 8.
    return {1: 32, 2: 16}.get(jnp.dtype(dtype).itemsize, 8)


def _vmem_capacity_bytes() -> int:
    try:
        return int(pltpu.get_tpu_info().vmem_capacity_bytes)
    except Exception:
        return 64 * _MIB  # conservative: assume a 64 MiB (v7x-class) part


def _supports_native_bf16() -> bool:
    try:
        kind = jax.devices()[0].device_kind.lower()
    except Exception:
        return False
    for tag in ("v2", "v3", "v4", "v5"):  # no bf16 VALUs on these generations
        if tag in kind:
            return False
    return "tpu" in kind


def _choose_fold(M: int, D: int) -> int:
    """Pick k | M so the folded row width k*D is as lane-dense as possible."""
    if D == 0 or M <= 1 or D % 128 == 0:
        return 1
    best_k = 1
    best_eff = D / ((-(-D // 128)) * 128)
    for k in range(2, min(M, 128) + 1):
        if M % k:
            continue
        dk = D * k
        if dk > 65536:            # keep folded rows a reasonable tile width
            break
        if dk % 128 == 0:
            return k              # smallest perfectly lane-dense fold
        eff = dk / ((-(-dk // 128)) * 128)
        if eff > best_eff * 1.05:
            best_k, best_eff = k, eff
    return best_k


def ssf(x, scale, shift, *, out_dtype=None):
    """out = x * scale + shift with scale/shift of shape (in_dim,)."""
    orig_shape = x.shape
    D = int(orig_shape[-1])
    assert scale.shape == (D,) and shift.shape == (D,)

    if out_dtype is None:
        out_dtype = jnp.result_type(x.dtype, scale.dtype, shift.dtype)
    out_dtype = jnp.dtype(out_dtype)

    M = 1
    for s in orig_shape[:-1]:
        M *= int(s)

    if M == 0 or D == 0:
        return (x.astype(out_dtype) * scale.astype(out_dtype)
                + shift.astype(out_dtype)).reshape(orig_shape)

    # ---- Compute dtype: bf16-native on v6e/v7x when everything is bf16.
    compute_dtype = jnp.float32
    if (x.dtype == jnp.bfloat16 and scale.dtype == jnp.bfloat16
            and shift.dtype == jnp.bfloat16 and out_dtype == jnp.bfloat16
            and _supports_native_bf16()):
        compute_dtype = jnp.bfloat16

    # ---- Lane-dense folding: fold k rows into one so row width ~ multiple of 128.
    k = _choose_fold(M, D)
    Dk = D * k
    Mf = M // k

    x2 = x.reshape(Mf, Dk)                       # contiguous reshape: no copy
    if k > 1:
        scale_row = jnp.tile(scale, k).reshape(1, Dk)
        shift_row = jnp.tile(shift, k).reshape(1, Dk)
    else:
        scale_row = scale.reshape(1, Dk)
        shift_row = shift.reshape(1, Dk)

    # ---- Generation-aware VMEM budget.
    cap = _vmem_capacity_bytes()
    if cap >= 96 * _MIB:                          # v5e / v6e (128 MiB VMEM)
        tile_budget = 32 * _MIB
        vmem_limit = 96 * _MIB
    else:                                         # v7x-class (64 MiB / TC)
        tile_budget = 12 * _MIB
        vmem_limit = max(min(cap - 16 * _MIB, 44 * _MIB), 24 * _MIB)

    in_item = jnp.dtype(x.dtype).itemsize
    out_item = out_dtype.itemsize
    comp_item = jnp.dtype(compute_dtype).itemsize
    # 2x in (double buffered) + 2x out (double buffered) + widened compute temp.
    bytes_per_elem = 2 * in_item + 2 * out_item
    if comp_item > max(in_item, out_item):
        bytes_per_elem += comp_item

    sublane = max(_sublane_multiple(x.dtype), _sublane_multiple(out_dtype))

    # ---- Feature-axis blocking (only when a sublane-height tile already blows
    #      the budget, e.g. extremely wide D).  td is a multiple of 128; the
    #      ragged last block (if any) is masked by Pallas.
    td = Dk
    if Dk > 128 and bytes_per_elem * sublane * Dk > tile_budget:
        td = (tile_budget // (bytes_per_elem * sublane)) // 128 * 128
        td = int(max(128, min(td, (Dk // 128) * 128)))
    nd = pl.cdiv(Dk, td)

    # ---- Row-axis tiling from the VMEM budget, with a minimum block count.
    if Mf <= sublane:
        tm = Mf                                   # genuinely tiny: full extent
    else:
        tm = tile_budget // (bytes_per_elem * td)
        tm = int(max(sublane, (tm // sublane) * sublane))
        if Mf >= _MIN_ROW_BLOCKS * sublane:
            cap_tm = max(sublane, (Mf // _MIN_ROW_BLOCKS) // sublane * sublane)
            tm = min(tm, cap_tm)                  # guarantee >= ~8 row blocks
        else:
            tm = min(tm, sublane)                 # small input: a few blocks
        # Prefer an even number of row blocks (even split over v7x's 2 TCs).
        nm = pl.cdiv(Mf, tm)
        if nm > 1 and nm % 2 == 1:
            tm_alt = ((pl.cdiv(Mf, nm + 1) + sublane - 1) // sublane) * sublane
            if tm_alt >= sublane and pl.cdiv(Mf, tm_alt) % 2 == 0:
                tm = tm_alt
    nm = pl.cdiv(Mf, tm)

    kernel = functools.partial(_ssf_kernel, compute_dtype=compute_dtype)

    out = pl.pallas_call(
        kernel,
        out_shape=jax.ShapeDtypeStruct((Mf, Dk), out_dtype),
        grid_spec=pltpu.PrefetchScalarGridSpec(
            num_scalar_prefetch=0,
            grid=(nm, nd),
            in_specs=[
                pl.BlockSpec((tm, td), lambda i, j: (i, j)),
                pl.BlockSpec((1, td), lambda i, j: (0, j)),
                pl.BlockSpec((1, td), lambda i, j: (0, j)),
            ],
            out_specs=pl.BlockSpec((tm, td), lambda i, j: (i, j)),
        ),
        compiler_params=pltpu.CompilerParams(
            dimension_semantics=("parallel", "parallel"),
            vmem_limit_bytes=int(vmem_limit),
        ),
    )(x2, scale_row, shift_row)

    return out.reshape(orig_shape)


if __name__ == "__main__":
    key = jax.random.PRNGKey(0)
    k_x, k_scale, k_shift, k_x2, k_x3, k_x4, k_x5 = jax.random.split(key, 7)

    # ---- Primary test: small shapes consistent with the module (batch=2, seq=8,
    # in_dim=32).  Parameter init mirrors nn.init.normal_ in SSF.__init__:
    #   scale ~ N(1.0, 0.02), shift ~ N(0.0, 0.02)
    batch, seq, in_dim = 2, 8, 32
    x = jax.random.normal(k_x, (batch, seq, in_dim), dtype=jnp.float32)
    scale = 1.0 + 0.02 * jax.random.normal(k_scale, (in_dim,), dtype=jnp.float32)
    shift = 0.02 * jax.random.normal(k_shift, (in_dim,), dtype=jnp.float32)

    out = ssf(x, scale, shift)
    jax.block_until_ready(out)
    ref = x * scale + shift
    assert out.shape == x.shape
    assert jnp.allclose(out, ref, atol=1e-6, rtol=1e-6)

    # ---- Multi-block grid with a ragged last row block, D already lane-dense.
    M2, D2 = 2049, 384
    x_big = jax.random.normal(k_x2, (M2, D2), dtype=jnp.float32)
    scale_b = 1.0 + 0.02 * jax.random.normal(k_scale, (D2,), dtype=jnp.float32)
    shift_b = 0.02 * jax.random.normal(k_shift, (D2,), dtype=jnp.float32)
    out_big = ssf(x_big, scale_b, shift_b)
    jax.block_until_ready(out_big)
    assert jnp.allclose(out_big, x_big * scale_b + shift_b, atol=1e-6, rtol=1e-6)

    # ---- Fold fallback: D not a multiple of 128 and M has no "perfect" fold.
    M3, D3 = 6, 40
    x_f = jax.random.normal(k_x3, (M3, D3), dtype=jnp.float32)
    scale_f = 1.0 + 0.02 * jax.random.normal(k_scale, (D3,), dtype=jnp.float32)
    shift_f = 0.02 * jax.random.normal(k_shift, (D3,), dtype=jnp.float32)
    out_f = ssf(x_f, scale_f, shift_f)
    jax.block_until_ready(out_f)
    assert jnp.allclose(out_f, x_f * scale_f + shift_f, atol=1e-6, rtol=1e-6)

    # ---- Very wide feature dim: exercises the feature-axis (td) blocked path.
    M4, D4 = 16, 262244
    x_w = jax.random.normal(k_x4, (M4, D4), dtype=jnp.float32)
    scale_w = 1.0 + 0.02 * jax.random.normal(k_scale, (D4,), dtype=jnp.float32)
    shift_w = 0.02 * jax.random.normal(k_shift, (D4,), dtype=jnp.float32)
    out_w = ssf(x_w, scale_w, shift_w)
    jax.block_until_ready(out_w)
    assert jnp.allclose(out_w, x_w * scale_w + shift_w, atol=1e-6, rtol=1e-6)

    # ---- bf16 path (native bf16 compute on v6e/v7x, f32 upcast on v5e & older).
    M5, D5 = 512, 256
    x_h = jax.random.normal(k_x5, (M5, D5), dtype=jnp.float32)
    scale_h = 1.0 + 0.02 * jax.random.normal(k_scale, (D5,), dtype=jnp.float32)
    shift_h = 0.02 * jax.random.normal(k_shift, (D5,), dtype=jnp.float32)
    out_h = ssf(x_h.astype(jnp.bfloat16), scale_h.astype(jnp.bfloat16),
                shift_h.astype(jnp.bfloat16))
    jax.block_until_ready(out_h)
    assert out_h.dtype == jnp.bfloat16
    assert jnp.allclose(out_h.astype(jnp.float32), x_h * scale_h + shift_h,
                        atol=0.1, rtol=0.1)

    print("KERNEL_OK")
</pallas_src>

<mosaic_0001>
module attributes {stable_mosaic.version = 11 : i64} {
  func.func @_ssf_kernel(%arg0: i32, %arg1: i32, %arg2: memref<4x128xf32, #tpu.memory_space<vmem>>, %arg3: memref<1x128xf32, #tpu.memory_space<vmem>>, %arg4: memref<1x128xf32, #tpu.memory_space<vmem>>, %arg5: memref<4x128xf32, #tpu.memory_space<vmem>>) attributes {dimension_semantics = [#tpu.dimension_semantics<parallel>, #tpu.dimension_semantics<parallel>], iteration_bounds = array<i64: 1, 1>, scalar_prefetch = 0 : i64, scratch_operands = 0 : i64, tpu.core_type = #tpu.core_type<tc>, window_params = [{transform_indices = @transform_0, window_bounds = array<i64: 4, 128>}, {transform_indices = @transform_1, window_bounds = array<i64: 1, 128>}, {transform_indices = @transform_2, window_bounds = array<i64: 1, 128>}, {transform_indices = @transform_3, window_bounds = array<i64: 4, 128>}]} {
    %c0 = arith.constant 0 : index
    %c0_0 = arith.constant 0 : index
    %0 = vector.load %arg2[%c0, %c0_0] : memref<4x128xf32, #tpu.memory_space<vmem>>, vector<4x128xf32>
    %c0_1 = arith.constant 0 : index
    %c0_2 = arith.constant 0 : index
    %1 = vector.load %arg3[%c0_1, %c0_2] : memref<1x128xf32, #tpu.memory_space<vmem>>, vector<1x128xf32>
    %c0_3 = arith.constant 0 : index
    %c0_4 = arith.constant 0 : index
    %2 = vector.load %arg4[%c0_3, %c0_4] : memref<1x128xf32, #tpu.memory_space<vmem>>, vector<1x128xf32>
    %3 = vector.broadcast %1 : vector<1x128xf32> to vector<4x128xf32>
    %4 = arith.mulf %0, %3 : vector<4x128xf32>
    %5 = vector.broadcast %2 : vector<1x128xf32> to vector<4x128xf32>
    %6 = arith.addf %4, %5 : vector<4x128xf32>
    %c0_5 = arith.constant 0 : index
    %c0_6 = arith.constant 0 : index
    %7 = vector.load %arg5[%c0_5, %c0_6] : memref<4x128xf32, #tpu.memory_space<vmem>>, vector<4x128xf32>
    tpu.vector_store %arg5[%c0_5, %c0_6], %6 {strides = array<i32>} : memref<4x128xf32, #tpu.memory_space<vmem>>, vector<4x128xf32>,
    return
  }
  func.func @transform_0(%arg0: i32, %arg1: i32) -> (i32, i32) {
    %c0_i32 = arith.constant 0 : i32
    return %arg0, %arg1 : i32, i32
  }
  func.func @transform_1(%arg0: i32, %arg1: i32) -> (i32, i32) {
    %c0_i32 = arith.constant 0 : i32
    %c0_i32_0 = arith.constant 0 : i32
    return %c0_i32, %arg1 : i32, i32
  }
  func.func @transform_2(%arg0: i32, %arg1: i32) -> (i32, i32) {
    %c0_i32 = arith.constant 0 : i32
    %c0_i32_0 = arith.constant 0 : i32
    return %c0_i32, %arg1 : i32, i32
  }
  func.func @transform_3(%arg0: i32, %arg1: i32) -> (i32, i32) {
    %c0_i32 = arith.constant 0 : i32
    return %arg0, %arg1 : i32, i32
  }
}

</mosaic_0001>

<llo_original>
// kernel: tpu_custom_call.1
$region0: #{tpu_custom_call.1}
  #allocation0 [shape = 'u32[]', space=smem, size = 0x4, offset = 0x4, fixed_abs, tag = 'smem constant byte address 0x4 - core index']
  #allocation1 [shape = 'u32[144,128]{1,0:T(1,128)}', space=vmem, size = 0x12000, scoped, tag = 'internal scratch']
  %s0 = inlined_call_operand.hbm [shape: f32[4,128], index: 0, kind: input, shape index: {}]
  %s1 = inlined_call_operand.vmem [shape: f32[1,128], index: 1, kind: input, shape index: {}]
  %s2 = inlined_call_operand.vmem [shape: f32[1,128], index: 2, kind: input, shape index: {}]
  %s3 = inlined_call_operand.hbm [shape: f32[4,128], index: 3, kind: output, shape index: {}]
  %s4 = sld [smem:[#allocation0]]
  $region26: #{tpu_custom_call.1} parent=0
    _
  %s6 = ssub.s32 1, %s4
  %s7 = scalar_select 0, %s6, %s4
  $region1: #{tpu_custom_call.1} parent=0
    #allocation2 [shape = 'u8[2048]{0}', space=vmem, size = 0x800, scoped, tag = 'input window, operand 0, single buffered']
    #allocation3 [shape = 's32[1]{0}', space=sflag, size = 0x4, scoped, tag = 'scoped memory for tpu_custom_call.1']
    #allocation4 [shape = 's32[1]{0}', space=sflag, size = 0x4, scoped, tag = 'scoped memory for tpu_custom_call.1']
    #allocation5 [shape = 'u8[2048]{0}', space=vmem, size = 0x800, scoped, tag = 'output window, operand 0, single buffered']
    %8 = vsyncpa [#allocation3], 0
    %9 = vsyncpa [#allocation4], 0
    // Predicated region
    $region2: #{tpu_custom_call.1} parent=1 // pred_check
      _
    $region3: #{tpu_custom_call.1} parent=1 // pred_check_branch
      %11 = sbr.rel (0) target = $region5
    $region4: #{tpu_custom_call.1} parent=1 // pred_region
      %s13 = ssub.s32 64, 64
      %14 = vsyncadd [#allocation3], %s13
      %s16 = sshll.u32 [#allocation2], 4
      %s17 = int_to_ptr.vmem [resolvable:$true] %s16
      %19 = dma.hbm_to_vmem [thread:$0]  %s0, 64, %s17, [#allocation3]
    $region5: #{tpu_custom_call.1} parent=1 // pred_fallthru
      _
    // Predicated region
    $region6: #{tpu_custom_call.1} parent=1 // pred_check
      _
    $region7: #{tpu_custom_call.1} parent=1 // pred_check_branch
      %21 = sbr.rel (0) target = $region9
    $region8: #{tpu_custom_call.1} parent=1 // pred_region
      _
    $region9: #{tpu_custom_call.1} parent=1 // pred_fallthru
      _
    // Predicated region
    $region10: #{tpu_custom_call.1} parent=1 // pred_check
      _
    $region11: #{tpu_custom_call.1} parent=1 // pred_check_branch
      %23 = sbr.rel (0) target = $region13
    $region12: #{tpu_custom_call.1} parent=1 // pred_region
      _
    $region13: #{tpu_custom_call.1} parent=1 // pred_fallthru
      _
    // Predicated region
    $region14: #{tpu_custom_call.1} parent=1 // pred_check
      _
    $region15: #{tpu_custom_call.1} parent=1 // pred_check_branch
      %25 = sbr.rel (0) target = $region17
    $region16: #{tpu_custom_call.1} parent=1 // pred_region
      %26 = dma.done [#allocation3], 64
    $region17: #{tpu_custom_call.1} parent=1 // pred_fallthru
      _
    %v27 = vld [vmem:[#allocation2] sm:$0xf]
    %v28 = vld [vmem:[%s1] sm:$0x1]
    %v29 = vld [vmem:[%s2] sm:$0x1]
    %v31 = vlaneseq
    %v32 = vshrl.u32 %v31, 7
    %v33 = vsub.s32 0, %v32
    %v34 = vrot.slane %v28, %v33
    %v36 = vmul.f32 %v27, %v34
    %v38 = vlaneseq
    %v39 = vshrl.u32 %v38, 7
    %v40 = vsub.s32 0, %v39
    %v41 = vrot.slane %v29, %v40
    %v43 = vadd.f32 %v36, %v41
    %44 = vst [vmem:[#allocation5] sm:$0xf] %v43
    // Predicated region
    $region18: #{tpu_custom_call.1} parent=1 // pred_check
      _
    $region19: #{tpu_custom_call.1} parent=1 // pred_check_branch
      %46 = sbr.rel (0) target = $region21
    $region20: #{tpu_custom_call.1} parent=1 // pred_region
      %s48 = ssub.s32 64, 64
      %49 = vsyncadd [#allocation4], %s48
      %s51 = sshll.u32 [#allocation5], 4
      %s52 = int_to_ptr.vmem [resolvable:$true] %s51
      %54 = dma.vmem_to_hbm [thread:$0]  %s52, 64, %s3, [#allocation4]
    $region21: #{tpu_custom_call.1} parent=1 // pred_fallthru
      _
    // Predicated region
    $region22: #{tpu_custom_call.1} parent=1 // pred_check
      _
    $region23: #{tpu_custom_call.1} parent=1 // pred_check_branch
      %56 = sbr.rel (0) target = $region25
    $region24: #{tpu_custom_call.1} parent=1 // pred_region
      %57 = dma.done [#allocation4], 64
    $region25: #{tpu_custom_call.1} parent=1 // pred_fallthru
      _
    %58 = vsyncpa [#allocation3], 1
    %59 = vsyncpa [#allocation4], 1

</llo_original>
